<compile_context>
chip_gen: v7x
topology: tpu7x:2x2x1
jax: 0.10.0
libtpu: 0.0.40
codegen_flags: <defaults>
</compile_context>

<pallas_src>
import functools

import jax
import jax.numpy as jnp
from jax.experimental import pallas as pl
from jax.experimental.pallas import tpu as pltpu


def _cdiv(a: int, b: int) -> int:
    return -(-a // b)


def _round_up(n: int, m: int) -> int:
    return ((n + m - 1) // m) * m


def _choose_batch_tiles(B: int, max_rows: int):
    """Balanced batch tiling: minimal padding, >=2 steps when B is large."""
    nsteps = max(1, _cdiv(B, max_rows))
    # v7x: prefer >=2 grid steps so the "parallel" axis shards across both
    # TensorCores, as long as each step still keeps >=128 real rows.
    if nsteps == 1 and B >= 256:
        nsteps = 2
    tm = max(16, _round_up(_cdiv(B, nsteps), 16))  # 16 = bf16 sublane packing
    b_pad = nsteps * tm
    return tm, b_pad


def _mlp_kernel(x_ref, w1_ref, b1_ref, w2_ref, b2_ref, o_ref):
    # In-kernel f32 -> bf16 cast of the activation stream (cheap VPU pack,
    # plenty of slot slack in this mem-bound regime): x is read from HBM once
    # in f32 instead of paying a separate wrapper-side cast pass.
    x_bf16 = x_ref[...].astype(jnp.bfloat16)
    # First linear: bf16 MXU operands, f32 accumulation.
    h = jnp.dot(x_bf16, w1_ref[...], preferred_element_type=jnp.float32)
    # Bias add + ReLU in f32 on the VPU (b1 is (1, H) -> broadcasts over rows).
    h = jnp.maximum(h + b1_ref[...], 0.0)
    # Second linear: feed the MXU bf16 again, accumulate in f32.
    y = jnp.dot(h.astype(jnp.bfloat16), w2_ref[...],
                preferred_element_type=jnp.float32)
    o_ref[...] = (y + b2_ref[...]).astype(o_ref.dtype)


@functools.partial(
    jax.jit, static_argnames=("block_rows", "out_dtype", "min_pallas_batch"))
def projection_head_forward(x, w1, b1, w2, b2, *,
                            block_rows: int = 256,
                            out_dtype=jnp.float32,
                            min_pallas_batch: int = 64):
    """x: (B, ...) flattened to (B, input_dim); returns (B, hidden_dim)."""
    B = x.shape[0]
    x2 = x.reshape(B, -1)
    input_dim = x2.shape[1]
    hidden_dim = w2.shape[1]

    # Tiny batches: pallas_call launch + DMA latency dominates; let XLA fuse.
    if B < min_pallas_batch:
        h = jnp.maximum(x2 @ w1 + b1, 0.0)
        return (h @ w2 + b2).astype(out_dtype)

    TM, B_pad = _choose_batch_tiles(B, block_rows)
    if B_pad != B:
        x2 = jnp.pad(x2, ((0, B_pad - B), (0, 0)))

    # Weights are VMEM-resident across grid steps; cast them once here.
    w1_bf16 = w1.astype(jnp.bfloat16)
    w2_bf16 = w2.astype(jnp.bfloat16)
    b1_f32 = b1.reshape(1, hidden_dim).astype(jnp.float32)
    b2_f32 = b2.reshape(1, hidden_dim).astype(jnp.float32)

    grid = (B_pad // TM,)
    out_itemsize = jnp.dtype(out_dtype).itemsize

    cost = pl.CostEstimate(
        flops=2 * B_pad * input_dim * hidden_dim
        + 2 * B_pad * hidden_dim * hidden_dim,
        transcendentals=0,
        bytes_accessed=(x2.size * 4                       # x read once, f32
                        + w1_bf16.size * 2 + w2_bf16.size * 2
                        + b1_f32.size * 4 + b2_f32.size * 4
                        + B_pad * hidden_dim * out_itemsize),
    )

    # Working-set estimate (default double-buffering on every operand).
    vmem_estimate = (2 * TM * input_dim * 4            # x tiles (f32)
                     + 2 * input_dim * hidden_dim * 2  # W1 (bf16)
                     + 2 * hidden_dim * hidden_dim * 2  # W2 (bf16)
                     + 4 * 2 * hidden_dim * 4           # biases (f32)
                     + 2 * TM * hidden_dim * out_itemsize)  # out tiles
    vmem_limit = int(min(100 * 1024 * 1024,
                         max(32 * 1024 * 1024, 2 * vmem_estimate)))

    out = pl.pallas_call(
        _mlp_kernel,
        out_shape=jax.ShapeDtypeStruct((B_pad, hidden_dim), out_dtype),
        grid_spec=pltpu.PrefetchScalarGridSpec(
            num_scalar_prefetch=0,
            grid=grid,
            in_specs=[
                # x: tiled over the batch (sublane) axis, stays f32.
                pl.BlockSpec((TM, input_dim), lambda i: (i, 0)),
                # Weights / biases: same block every step -> VMEM-resident.
                pl.BlockSpec((input_dim, hidden_dim), lambda i: (0, 0)),
                pl.BlockSpec((1, hidden_dim), lambda i: (0, 0)),
                pl.BlockSpec((hidden_dim, hidden_dim), lambda i: (0, 0)),
                pl.BlockSpec((1, hidden_dim), lambda i: (0, 0)),
            ],
            out_specs=pl.BlockSpec((TM, hidden_dim), lambda i: (i, 0)),
        ),
        compiler_params=pltpu.CompilerParams(
            dimension_semantics=("parallel",),
            vmem_limit_bytes=vmem_limit,
        ),
        cost_estimate=cost,
    )(x2, w1_bf16, b1_f32, w2_bf16, b2_f32)

    return out[:B] if B_pad != B else out


def init_params(key, input_dim, hidden_dim):
    """Deterministic synthetic init matching nn.Linear shapes.

    PyTorch stores Linear weights as (out, in); we keep the transposed
    (in, out) layout so the kernel computes y = x @ W + b (== x @ W_pt.T + b).
    """
    k1, k2, k3, k4 = jax.random.split(key, 4)
    s1 = 1.0 / jnp.sqrt(input_dim)
    s2 = 1.0 / jnp.sqrt(hidden_dim)
    w1 = jax.random.uniform(k1, (input_dim, hidden_dim), jnp.float32, -s1, s1)
    b1 = jax.random.uniform(k2, (hidden_dim,), jnp.float32, -s1, s1)
    w2 = jax.random.uniform(k3, (hidden_dim, hidden_dim), jnp.float32, -s2, s2)
    b2 = jax.random.uniform(k4, (hidden_dim,), jnp.float32, -s2, s2)
    return w1, b1, w2, b2


if __name__ == "__main__":
    # Small shapes consistent with the module: input_dim = 256 (= 4*8*8),
    # config.tc_hidden_dim = 128, batch = 2.
    B, C, H, W = 2, 4, 8, 8
    input_dim = C * H * W
    hidden_dim = 128

    key = jax.random.PRNGKey(0)
    kx, kp = jax.random.split(key)
    x = jax.random.normal(kx, (B, C, H, W), dtype=jnp.float32)
    w1, b1, w2, b2 = init_params(kp, input_dim, hidden_dim)

    def ref_bf16(xa):  # mirrors the kernel's bf16-operand / f32-accum math
        xf = xa.reshape(xa.shape[0], -1)
        h = jnp.dot(xf.astype(jnp.bfloat16), w1.astype(jnp.bfloat16),
                    preferred_element_type=jnp.float32) + b1
        h = jnp.maximum(h, 0.0)
        return jnp.dot(h.astype(jnp.bfloat16), w2.astype(jnp.bfloat16),
                       preferred_element_type=jnp.float32) + b2

    def ref_f32(xa):  # PyTorch f32 Linear semantics
        xf = xa.reshape(xa.shape[0], -1)
        return jnp.maximum(xf @ w1 + b1, 0.0) @ w2 + b2

    # 1) Force the Pallas path even at tiny B so the kernel itself runs.
    out = projection_head_forward(x, w1, b1, w2, b2, min_pallas_batch=0)
    out = jax.block_until_ready(out)
    assert out.shape == (B, hidden_dim)
    assert jnp.allclose(out, ref_bf16(x), atol=2e-3, rtol=2e-3)
    assert jnp.allclose(out, ref_f32(x), atol=5e-2, rtol=5e-2)

    # 2) Multi-tile path: several grid steps + small batch padding.
    B2 = 40
    x2 = jax.random.normal(jax.random.PRNGKey(1), (B2, C, H, W), jnp.float32)
    out2 = projection_head_forward(x2, w1, b1, w2, b2,
                                   block_rows=16, min_pallas_batch=0)
    out2 = jax.block_until_ready(out2)
    assert out2.shape == (B2, hidden_dim)
    assert jnp.allclose(out2, ref_bf16(x2), atol=2e-3, rtol=2e-3)

    # 3) Optional bf16-output variant (halves writeback bytes).
    out_bf = projection_head_forward(x, w1, b1, w2, b2,
                                     out_dtype=jnp.bfloat16,
                                     min_pallas_batch=0)
    out_bf = jax.block_until_ready(out_bf)
    assert out_bf.dtype == jnp.bfloat16
    assert jnp.allclose(out_bf.astype(jnp.float32), ref_bf16(x),
                        atol=1e-2, rtol=1e-2)

    # 4) Default dispatch at tiny batch takes the plain-XLA fallback (f32).
    out3 = jax.block_until_ready(projection_head_forward(x, w1, b1, w2, b2))
    assert jnp.allclose(out3, ref_f32(x), atol=1e-3, rtol=1e-3)

    print("KERNEL_OK")
</pallas_src>

<mosaic_0001>
module attributes {stable_mosaic.version = 11 : i64} {
  func.func @_mlp_kernel(%arg0: i32, %arg1: memref<16x256xf32, #tpu.memory_space<vmem>>, %arg2: memref<256x128xbf16, #tpu.memory_space<vmem>>, %arg3: memref<1x128xf32, #tpu.memory_space<vmem>>, %arg4: memref<128x128xbf16, #tpu.memory_space<vmem>>, %arg5: memref<1x128xf32, #tpu.memory_space<vmem>>, %arg6: memref<16x128xf32, #tpu.memory_space<vmem>>) attributes {dimension_semantics = [#tpu.dimension_semantics<parallel>], iteration_bounds = array<i64: 1>, scalar_prefetch = 0 : i64, scratch_operands = 0 : i64, tpu.core_type = #tpu.core_type<tc>, window_params = [{transform_indices = @transform_0, window_bounds = array<i64: 16, 256>}, {pipeline_mode = #tpu.pipeline_mode<synchronous>, transform_indices = @transform_1, window_bounds = array<i64: 256, 128>}, {pipeline_mode = #tpu.pipeline_mode<synchronous>, transform_indices = @transform_2, window_bounds = array<i64: 1, 128>}, {pipeline_mode = #tpu.pipeline_mode<synchronous>, transform_indices = @transform_3, window_bounds = array<i64: 128, 128>}, {pipeline_mode = #tpu.pipeline_mode<synchronous>, transform_indices = @transform_4, window_bounds = array<i64: 1, 128>}, {transform_indices = @transform_5, window_bounds = array<i64: 16, 128>}]} {
    %c0 = arith.constant 0 : index
    %c0_0 = arith.constant 0 : index
    %0 = vector.load %arg1[%c0, %c0_0] : memref<16x256xf32, #tpu.memory_space<vmem>>, vector<16x256xf32>
    %1 = arith.truncf %0 : vector<16x256xf32> to vector<16x256xbf16>
    %c0_1 = arith.constant 0 : index
    %c0_2 = arith.constant 0 : index
    %2 = vector.load %arg2[%c0_1, %c0_2] : memref<256x128xbf16, #tpu.memory_space<vmem>>, vector<256x128xbf16>
    %cst = arith.constant dense<0.000000e+00> : vector<16x128xf32>
    %3 = tpu.matmul %1, %2, %cst {dimension_numbers = #tpu.dot_dimension_numbers<[1], [0], [0], [1], [0, 0, 1, 1], [], []>} : vector<16x256xbf16>, vector<256x128xbf16>, vector<16x128xf32> -> vector<16x128xf32>
    %c0_3 = arith.constant 0 : index
    %c0_4 = arith.constant 0 : index
    %4 = vector.load %arg3[%c0_3, %c0_4] : memref<1x128xf32, #tpu.memory_space<vmem>>, vector<1x128xf32>
    %5 = vector.broadcast %4 : vector<1x128xf32> to vector<16x128xf32>
    %6 = arith.addf %3, %5 : vector<16x128xf32>
    %cst_5 = arith.constant 0.000000e+00 : f32
    %7 = vector.broadcast %cst_5 : f32 to vector<16x128xf32>
    %8 = arith.maximumf %6, %7 : vector<16x128xf32>
    %9 = arith.truncf %8 : vector<16x128xf32> to vector<16x128xbf16>
    %c0_6 = arith.constant 0 : index
    %c0_7 = arith.constant 0 : index
    %10 = vector.load %arg4[%c0_6, %c0_7] : memref<128x128xbf16, #tpu.memory_space<vmem>>, vector<128x128xbf16>
    %cst_8 = arith.constant dense<0.000000e+00> : vector<16x128xf32>
    %11 = tpu.matmul %9, %10, %cst_8 {dimension_numbers = #tpu.dot_dimension_numbers<[1], [0], [0], [1], [0, 0, 1, 1], [], []>} : vector<16x128xbf16>, vector<128x128xbf16>, vector<16x128xf32> -> vector<16x128xf32>
    %c0_9 = arith.constant 0 : index
    %c0_10 = arith.constant 0 : index
    %12 = vector.load %arg5[%c0_9, %c0_10] : memref<1x128xf32, #tpu.memory_space<vmem>>, vector<1x128xf32>
    %13 = vector.broadcast %12 : vector<1x128xf32> to vector<16x128xf32>
    %14 = arith.addf %11, %13 : vector<16x128xf32>
    %c0_11 = arith.constant 0 : index
    %c0_12 = arith.constant 0 : index
    %15 = vector.load %arg6[%c0_11, %c0_12] : memref<16x128xf32, #tpu.memory_space<vmem>>, vector<16x128xf32>
    tpu.vector_store %arg6[%c0_11, %c0_12], %14 {strides = array<i32>} : memref<16x128xf32, #tpu.memory_space<vmem>>, vector<16x128xf32>,
    return
  }
  func.func @transform_0(%arg0: i32) -> (i32, i32) {
    %c0_i32 = arith.constant 0 : i32
    %c0_i32_0 = arith.constant 0 : i32
    return %arg0, %c0_i32 : i32, i32
  }
  func.func @transform_1(%arg0: i32) -> (i32, i32) {
    %c0_i32 = arith.constant 0 : i32
    %c0_i32_0 = arith.constant 0 : i32
    %c0_i32_1 = arith.constant 0 : i32
    return %c0_i32, %c0_i32_0 : i32, i32
  }
  func.func @transform_2(%arg0: i32) -> (i32, i32) {
    %c0_i32 = arith.constant 0 : i32
    %c0_i32_0 = arith.constant 0 : i32
    %c0_i32_1 = arith.constant 0 : i32
    return %c0_i32, %c0_i32_0 : i32, i32
  }
  func.func @transform_3(%arg0: i32) -> (i32, i32) {
    %c0_i32 = arith.constant 0 : i32
    %c0_i32_0 = arith.constant 0 : i32
    %c0_i32_1 = arith.constant 0 : i32
    return %c0_i32, %c0_i32_0 : i32, i32
  }
  func.func @transform_4(%arg0: i32) -> (i32, i32) {
    %c0_i32 = arith.constant 0 : i32
    %c0_i32_0 = arith.constant 0 : i32
    %c0_i32_1 = arith.constant 0 : i32
    return %c0_i32, %c0_i32_0 : i32, i32
  }
  func.func @transform_5(%arg0: i32) -> (i32, i32) {
    %c0_i32 = arith.constant 0 : i32
    %c0_i32_0 = arith.constant 0 : i32
    return %arg0, %c0_i32 : i32, i32
  }
}

</mosaic_0001>

<llo_original>
// kernel: projection_head_forward.1
$region0: #{projection_head_forward.1}
  #allocation0 [shape = 'u32[]', space=smem, size = 0x4, offset = 0x4, fixed_abs, tag = 'smem constant byte address 0x4 - core index']
  #allocation1 [shape = 'u32[144,128]{1,0:T(1,128)}', space=vmem, size = 0x12000, scoped, tag = 'internal scratch']
  %s0 = inlined_call_operand.vmem [shape: f32[16,256], index: 0, kind: input, shape index: {}]
  %s1 = inlined_call_operand.vmem [shape: bf16[256,128], index: 1, kind: input, shape index: {}]
  %s2 = inlined_call_operand.vmem [shape: f32[1,128], index: 2, kind: input, shape index: {}]
  %s3 = inlined_call_operand.vmem [shape: bf16[128,128], index: 3, kind: input, shape index: {}]
  %s4 = inlined_call_operand.vmem [shape: f32[1,128], index: 4, kind: input, shape index: {}]
  %s5 = inlined_call_operand.vmem [shape: f32[16,128], index: 5, kind: output, shape index: {}]
  %s6 = sld [smem:[#allocation0]]
  $region30: #{projection_head_forward.1} parent=0
    _
  %s8 = ssub.s32 1, %s6
  %s9 = scalar_select 0, %s8, %s6
  // Predicated region
  $region2: #{projection_head_forward.1} parent=0 // pred_check
    _
  $region3: #{projection_head_forward.1} parent=0 // pred_check_branch
    %11 = sbr.rel (0) target = $region5
  $region4: #{projection_head_forward.1} parent=0 // pred_region
    _
  $region5: #{projection_head_forward.1} parent=0 // pred_fallthru
    _
  // Predicated region
  $region6: #{projection_head_forward.1} parent=0 // pred_check
    _
  $region7: #{projection_head_forward.1} parent=0 // pred_check_branch
    %13 = sbr.rel (0) target = $region9
  $region8: #{projection_head_forward.1} parent=0 // pred_region
    _
  $region9: #{projection_head_forward.1} parent=0 // pred_fallthru
    _
  // Predicated region
  $region10: #{projection_head_forward.1} parent=0 // pred_check
    _
  $region11: #{projection_head_forward.1} parent=0 // pred_check_branch
    %15 = sbr.rel (0) target = $region13
  $region12: #{projection_head_forward.1} parent=0 // pred_region
    _
  $region13: #{projection_head_forward.1} parent=0 // pred_fallthru
    _
  // Predicated region
  $region14: #{projection_head_forward.1} parent=0 // pred_check
    _
  $region15: #{projection_head_forward.1} parent=0 // pred_check_branch
    %17 = sbr.rel (0) target = $region17
  $region16: #{projection_head_forward.1} parent=0 // pred_region
    _
  $region17: #{projection_head_forward.1} parent=0 // pred_fallthru
    _
  // Predicated region
  $region18: #{projection_head_forward.1} parent=0 // pred_check
    _
  $region19: #{projection_head_forward.1} parent=0 // pred_check_branch
    %19 = sbr.rel (0) target = $region21
  $region20: #{projection_head_forward.1} parent=0 // pred_region
    _
  $region21: #{projection_head_forward.1} parent=0 // pred_fallthru
    _
  %v21 = vld [vmem:[%s0] sm:$0xff]
  %v22 = vld [vmem:[%s0 + $0x8] sm:$0xff]
  %v23 = vld [vmem:[%s0 + $0x10] sm:$0xff]
  %v24 = vld [vmem:[%s0 + $0x18] sm:$0xff]
  %v25 = vpack.c.bf16 %v23, %v21
  %v26 = vpack.c.bf16 %v24, %v22
  %v27 = vld [vmem:[%s1] sm:$0xf]
  %v28 = vld [vmem:[%s1 + $0x4] sm:$0xf]
  %v29 = vld [vmem:[%s1 + $0x8] sm:$0xf]
  %v30 = vld [vmem:[%s1 + $0xc] sm:$0xf]
  %v31 = vld [vmem:[%s1 + $0x10] sm:$0xf]
  %v32 = vld [vmem:[%s1 + $0x14] sm:$0xf]
  %v33 = vld [vmem:[%s1 + $0x18] sm:$0xf]
  %v34 = vld [vmem:[%s1 + $0x1c] sm:$0xf]
  %v35 = vld [vmem:[%s1 + $0x20] sm:$0xf]
  %v36 = vld [vmem:[%s1 + $0x24] sm:$0xf]
  %v37 = vld [vmem:[%s1 + $0x28] sm:$0xf]
  %v38 = vld [vmem:[%s1 + $0x2c] sm:$0xf]
  %v39 = vld [vmem:[%s1 + $0x30] sm:$0xf]
  %v40 = vld [vmem:[%s1 + $0x34] sm:$0xf]
  %v41 = vld [vmem:[%s1 + $0x38] sm:$0xf]
  %v42 = vld [vmem:[%s1 + $0x3c] sm:$0xf]
  %v43 = vld [vmem:[%s1 + $0x40] sm:$0xf]
  %v44 = vld [vmem:[%s1 + $0x44] sm:$0xf]
  %v45 = vld [vmem:[%s1 + $0x48] sm:$0xf]
  %v46 = vld [vmem:[%s1 + $0x4c] sm:$0xf]
  %v47 = vld [vmem:[%s1 + $0x50] sm:$0xf]
  %v48 = vld [vmem:[%s1 + $0x54] sm:$0xf]
  %v49 = vld [vmem:[%s1 + $0x58] sm:$0xf]
  %v50 = vld [vmem:[%s1 + $0x5c] sm:$0xf]
  %v51 = vld [vmem:[%s1 + $0x60] sm:$0xf]
  %v52 = vld [vmem:[%s1 + $0x64] sm:$0xf]
  %v53 = vld [vmem:[%s1 + $0x68] sm:$0xf]
  %v54 = vld [vmem:[%s1 + $0x6c] sm:$0xf]
  %v55 = vld [vmem:[%s1 + $0x70] sm:$0xf]
  %v56 = vld [vmem:[%s1 + $0x74] sm:$0xf]
  %v57 = vld [vmem:[%s1 + $0x78] sm:$0xf]
  %v58 = vld [vmem:[%s1 + $0x7c] sm:$0xf]
  %v59 = vld [vmem:[%s2] sm:$0x1]
  %v61 = vlaneseq
  %v62 = vshrl.u32 %v61, 7
  %v63 = vsub.s32 0, %v62
  %v64 = vrot.slane %v59, %v63
  %v98 = vunpack.c.l.b16 %v27
  %v99 = vunpack.c.l.b16 %v28
  %v100 = vunpack.c.l.b16 %v29
  %v101 = vunpack.c.l.b16 %v30
  %v102 = vunpack.c.l.b16 %v31
  %v103 = vunpack.c.l.b16 %v32
  %v104 = vunpack.c.l.b16 %v33
  %v105 = vunpack.c.l.b16 %v34
  %v106 = vunpack.c.l.b16 %v35
  %v107 = vunpack.c.l.b16 %v36
  %v108 = vunpack.c.l.b16 %v37
  %v109 = vunpack.c.l.b16 %v38
  %v110 = vunpack.c.l.b16 %v39
  %v111 = vunpack.c.l.b16 %v40
  %v112 = vunpack.c.l.b16 %v41
  %v113 = vunpack.c.l.b16 %v42
  %v114 = vunpack.c.l.b16 %v43
  %v115 = vunpack.c.l.b16 %v44
  %v116 = vunpack.c.l.b16 %v45
  %v117 = vunpack.c.l.b16 %v46
  %v118 = vunpack.c.l.b16 %v47
  %v119 = vunpack.c.l.b16 %v48
  %v120 = vunpack.c.l.b16 %v49
  %v121 = vunpack.c.l.b16 %v50
  %v122 = vunpack.c.l.b16 %v51
  %v123 = vunpack.c.l.b16 %v52
  %v124 = vunpack.c.l.b16 %v53
  %v125 = vunpack.c.l.b16 %v54
  %v126 = vunpack.c.l.b16 %v55
  %v127 = vunpack.c.l.b16 %v56
  %v128 = vunpack.c.l.b16 %v57
  %v129 = vunpack.c.l.b16 %v58
  %v130 = vpack.c.b16 %v99, %v98
  %v131 = vpack.c.b16 %v101, %v100
  %v132 = vpack.c.b16 %v103, %v102
  %v133 = vpack.c.b16 %v105, %v104
  %v134 = vpack.c.b16 %v107, %v106
  %v135 = vpack.c.b16 %v109, %v108
  %v136 = vpack.c.b16 %v111, %v110
  %v137 = vpack.c.b16 %v113, %v112
  %v138 = vpack.c.b16 %v115, %v114
  %v139 = vpack.c.b16 %v117, %v116
  %v140 = vpack.c.b16 %v119, %v118
  %v141 = vpack.c.b16 %v121, %v120
  %v142 = vpack.c.b16 %v123, %v122
  %v143 = vpack.c.b16 %v125, %v124
  %v144 = vpack.c.b16 %v127, %v126
  %v145 = vpack.c.b16 %v129, %v128
  %162 = vmatprep.subr.bf16.mxu0 0
  %163 = vmatpush1.bf16.msra.mxu0 %v130
  %164 = vmatprep.subr.bf16.mxu0 0
  %165 = vmatpush1.bf16.msra.mxu0 %v131
  %166 = vmatprep.subr.bf16.mxu0 0
  %167 = vmatpush1.bf16.msra.mxu0 %v132
  %168 = vmatprep.subr.bf16.mxu0 0
  %169 = vmatpush1.bf16.msra.mxu0 %v133
  %170 = vmatprep.subr.bf16.mxu0 0
  %171 = vmatpush1.bf16.msra.mxu0 %v134
  %172 = vmatprep.subr.bf16.mxu0 0
  %173 = vmatpush1.bf16.msra.mxu0 %v135
  %174 = vmatprep.subr.bf16.mxu0 0
  %175 = vmatpush1.bf16.msra.mxu0 %v136
  %176 = vmatprep.subr.bf16.mxu0 0
  %177 = vmatpush1.bf16.msra.mxu0 %v137
  %178 = vmatprep.subr.bf16.mxu0 0
  %179 = vmatpush1.bf16.msra.mxu0 %v138
  %180 = vmatprep.subr.bf16.mxu0 0
  %181 = vmatpush1.bf16.msra.mxu0 %v139
  %182 = vmatprep.subr.bf16.mxu0 0
  %183 = vmatpush1.bf16.msra.mxu0 %v140
  %184 = vmatprep.subr.bf16.mxu0 0
  %185 = vmatpush1.bf16.msra.mxu0 %v141
  %186 = vmatprep.subr.bf16.mxu0 0
  %187 = vmatpush1.bf16.msra.mxu0 %v142
  %188 = vmatprep.subr.bf16.mxu0 0
  %189 = vmatpush1.bf16.msra.mxu0 %v143
  %190 = vmatprep.subr.bf16.mxu0 0
  %191 = vmatpush1.bf16.msra.mxu0 %v144
  %192 = vmatprep.subr.bf16.mxu0 0
  %193 = vmatpush1.bf16.msra.mxu0 %v145
  %194 = vmatprep.mubr.bf16.mxu0 %v26
  %195 = vmatmul.mubr.bf16.gmra.mrb[0].mxu0 %v25
  %v196 = vpop.f32.mrb[0].mxu0
  %v197 = vadd.f32 %v64, %v196
  %v198 = vpop.f32.mrb[0].mxu0
  %v199 = vpop.f32.mrb[0].mxu0
  %v200 = vadd.f32 %v64, %v199
  %v201 = vpop.f32.mrb[0].mxu0
  %202 = vdwg.mxu0
  %v203 = vmax.f32 %v197, 0.0
  %v204 = vmax.f32 %v200, 0.0
  %v205 = vpack.c.bf16 %v204, %v203
  %v206 = vld [vmem:[%s3] sm:$0xf]
  %v207 = vld [vmem:[%s3 + $0x4] sm:$0xf]
  %v208 = vld [vmem:[%s3 + $0x8] sm:$0xf]
  %v209 = vld [vmem:[%s3 + $0xc] sm:$0xf]
  %v210 = vld [vmem:[%s3 + $0x10] sm:$0xf]
  %v211 = vld [vmem:[%s3 + $0x14] sm:$0xf]
  %v212 = vld [vmem:[%s3 + $0x18] sm:$0xf]
  %v213 = vld [vmem:[%s3 + $0x1c] sm:$0xf]
  %v214 = vld [vmem:[%s3 + $0x20] sm:$0xf]
  %v215 = vld [vmem:[%s3 + $0x24] sm:$0xf]
  %v216 = vld [vmem:[%s3 + $0x28] sm:$0xf]
  %v217 = vld [vmem:[%s3 + $0x2c] sm:$0xf]
  %v218 = vld [vmem:[%s3 + $0x30] sm:$0xf]
  %v219 = vld [vmem:[%s3 + $0x34] sm:$0xf]
  %v220 = vld [vmem:[%s3 + $0x38] sm:$0xf]
  %v221 = vld [vmem:[%s3 + $0x3c] sm:$0xf]
  %v222 = vld [vmem:[%s4] sm:$0x1]
  %v224 = vlaneseq
  %v225 = vshrl.u32 %v224, 7
  %v226 = vsub.s32 0, %v225
  %v227 = vrot.slane %v222, %v226
  %v245 = vunpack.c.l.b16 %v206
  %v246 = vunpack.c.l.b16 %v207
  %v247 = vunpack.c.l.b16 %v208
  %v248 = vunpack.c.l.b16 %v209
  %v249 = vunpack.c.l.b16 %v210
  %v250 = vunpack.c.l.b16 %v211
  %v251 = vunpack.c.l.b16 %v212
  %v252 = vunpack.c.l.b16 %v213
  %v253 = vunpack.c.l.b16 %v214
  %v254 = vunpack.c.l.b16 %v215
  %v255 = vunpack.c.l.b16 %v216
  %v256 = vunpack.c.l.b16 %v217
  %v257 = vunpack.c.l.b16 %v218
  %v258 = vunpack.c.l.b16 %v219
  %v259 = vunpack.c.l.b16 %v220
  %v260 = vunpack.c.l.b16 %v221
  %v261 = vpack.c.b16 %v246, %v245
  %v262 = vpack.c.b16 %v248, %v247
  %v263 = vpack.c.b16 %v250, %v249
  %v264 = vpack.c.b16 %v252, %v251
  %v265 = vpack.c.b16 %v254, %v253
  %v266 = vpack.c.b16 %v256, %v255
  %v267 = vpack.c.b16 %v258, %v257
  %v268 = vpack.c.b16 %v260, %v259
  %277 = vmatprep.subr.bf16.mxu0 0
  %278 = vmatpush1.bf16.msra.mxu0 %v261
  %279 = vmatprep.subr.bf16.mxu0 0
  %280 = vmatpush1.bf16.msra.mxu0 %v262
  %281 = vmatprep.subr.bf16.mxu0 0
  %282 = vmatpush1.bf16.msra.mxu0 %v263
  %283 = vmatprep.subr.bf16.mxu0 0
  %284 = vmatpush1.bf16.msra.mxu0 %v264
  %285 = vmatprep.subr.bf16.mxu0 0
  %286 = vmatpush1.bf16.msra.mxu0 %v265
  %287 = vmatprep.subr.bf16.mxu0 0
  %288 = vmatpush1.bf16.msra.mxu0 %v266
  %289 = vmatprep.subr.bf16.mxu0 0
  %290 = vmatpush1.bf16.msra.mxu0 %v267
  %291 = vmatprep.subr.bf16.mxu0 0
  %292 = vmatpush1.bf16.msra.mxu0 %v268
  %293 = vmatprep.subr.bf16.mxu0 0
  %294 = vmatpush1.bf16.msra.mxu0 0
  %295 = vmatprep.subr.bf16.mxu0 0
  %296 = vmatpush1.bf16.msra.mxu0 0
  %297 = vmatprep.subr.bf16.mxu0 0
  %298 = vmatpush1.bf16.msra.mxu0 0
  %299 = vmatprep.subr.bf16.mxu0 0
  %300 = vmatpush1.bf16.msra.mxu0 0
  %301 = vmatprep.subr.bf16.mxu0 0
  %302 = vmatpush1.bf16.msra.mxu0 0
  %303 = vmatprep.subr.bf16.mxu0 0
  %304 = vmatpush1.bf16.msra.mxu0 0
  %305 = vmatprep.subr.bf16.mxu0 0
  %306 = vmatpush1.bf16.msra.mxu0 0
  %307 = vmatprep.subr.bf16.mxu0 0
  %308 = vmatpush1.bf16.msra.mxu0 0
  %309 = vmatprep.mubr.bf16.mxu0 0
  %310 = vmatmul.mubr.bf16.gmra.mrb[0].mxu0 %v205
  %v311 = vpop.f32.mrb[0].mxu0
  %v312 = vadd.f32 %v227, %v311
  %v313 = vpop.f32.mrb[0].mxu0
  %v314 = vpop.f32.mrb[0].mxu0
  %v315 = vadd.f32 %v227, %v314
  %v316 = vpop.f32.mrb[0].mxu0
  %317 = vdwg.mxu0
  %318 = vst [vmem:[%s5] sm:$0xff] %v312
  %319 = vst [vmem:[%s5 + $0x8] sm:$0xff] %v315
  // Predicated region
  $region22: #{projection_head_forward.1} parent=0 // pred_check
    _
  $region23: #{projection_head_forward.1} parent=0 // pred_check_branch
    %321 = sbr.rel (0) target = $region25
  $region24: #{projection_head_forward.1} parent=0 // pred_region
    _
  $region25: #{projection_head_forward.1} parent=0 // pred_fallthru
    _
  // Predicated region
  $region26: #{projection_head_forward.1} parent=0 // pred_check
    _
  $region27: #{projection_head_forward.1} parent=0 // pred_check_branch
    %323 = sbr.rel (0) target = $region29
  $region28: #{projection_head_forward.1} parent=0 // pred_region
    _
  $region29: #{projection_head_forward.1} parent=0 // pred_fallthru
    _

</llo_original>
